<compile_context>
chip_gen: v7x
topology: tpu7x:2x2x1
jax: 0.10.0
libtpu: 0.0.40
codegen_flags: <defaults>
</compile_context>

<pallas_src>
import functools
import math

import jax
import jax.numpy as jnp
from jax import lax
from jax.experimental import pallas as pl
from jax.experimental.pallas import tpu as pltpu

_NEG_LARGE = -1e30  # finite stand-in for -inf (keeps all softmax state finite)


def _round_up(x, m):
    return (x + m - 1) // m * m


def _device_kind():
    try:
        return jax.devices()[0].device_kind.lower()
    except Exception:  # pragma: no cover
        return "unknown"


# --------------------------------------------------------------------------- #
# Projection kernel:  out[S, O] = x[S, D] @ w[D, O]   (bf16 in, f32 acc, bf16 out)
# --------------------------------------------------------------------------- #
def _proj_kernel(x_ref, w_ref, o_ref):
    o_ref[...] = jnp.dot(
        x_ref[...], w_ref[...], preferred_element_type=jnp.float32
    ).astype(o_ref.dtype)


def _project(x_pad, w_t, tile_s, vmem_limit):
    S_pad, D = x_pad.shape
    O = w_t.shape[1]
    return pl.pallas_call(
        _proj_kernel,
        out_shape=jax.ShapeDtypeStruct((S_pad, O), x_pad.dtype),
        grid_spec=pltpu.PrefetchScalarGridSpec(
            num_scalar_prefetch=0,
            grid=(S_pad // tile_s,),
            in_specs=[
                pl.BlockSpec((tile_s, D), lambda i: (i, 0)),   # streamed rows
                pl.BlockSpec((D, O), lambda i: (0, 0)),        # resident weight
            ],
            out_specs=pl.BlockSpec((tile_s, O), lambda i: (i, 0)),
        ),
        compiler_params=pltpu.CompilerParams(
            dimension_semantics=("parallel",),
            vmem_limit_bytes=vmem_limit,
        ),
    )(x_pad, w_t)


# --------------------------------------------------------------------------- #
# Flash-style attention kernel over pre-projected Q/K/V.
# --------------------------------------------------------------------------- #
def _attn_kernel(flags_ref, qp_ref, kp_ref, vp_ref, mask_ref, out_ref,
                 m_sc, l_sc, acc_sc, *, use_bf16_exp):
    qi = pl.program_id(0)
    ki = pl.program_id(1)

    @pl.when(ki == 0)
    def _init():
        m_sc[...] = jnp.full_like(m_sc, _NEG_LARGE)
        l_sc[...] = jnp.zeros_like(l_sc)
        acc_sc[...] = jnp.zeros_like(acc_sc)

    # Skip fully-masked (qi, ki) blocks entirely (flag == 2): their contribution
    # to the online softmax is exactly zero.
    @pl.when(flags_ref[qi, ki] < 2)
    def _compute():
        # scores = Qp @ Kp^T : NT contraction, stays on the MXU (no XLU transpose).
        s = lax.dot_general(
            qp_ref[...], kp_ref[...],
            dimension_numbers=(((1,), (1,)), ((), ())),
            preferred_element_type=jnp.float32)

        # Masked entries get a large finite negative score (1 => masked).
        s = jnp.where(mask_ref[...] != 0, _NEG_LARGE, s)

        # Online softmax (statistics in f32).
        m_prev = m_sc[...]
        m_new = jnp.maximum(m_prev, jnp.max(s, axis=1, keepdims=True))
        alpha = jnp.exp(m_prev - m_new)
        shifted = s - m_new
        if use_bf16_exp:
            p = jnp.exp(shifted.astype(jnp.bfloat16))   # bf16 EUP (v6e/v7x)
        else:
            p = jnp.exp(shifted)                        # f32 EUP (v5e)

        l_sc[...] = alpha * l_sc[...] + jnp.sum(
            p.astype(jnp.float32), axis=1, keepdims=True)
        acc_sc[...] = alpha * acc_sc[...] + jnp.dot(
            p.astype(vp_ref.dtype), vp_ref[...],
            preferred_element_type=jnp.float32)
        m_sc[...] = m_new

    @pl.when(ki == pl.num_programs(1) - 1)
    def _finalize():
        out_ref[...] = (acc_sc[...] *
                        pl.reciprocal(l_sc[...], approx=True)).astype(out_ref.dtype)


# --------------------------------------------------------------------------- #
# Wrapper
# --------------------------------------------------------------------------- #
def head_forward(query, key, value, mask_idx, w_q, w_k, w_v,
                 *, matmul_dtype=jnp.bfloat16):
    """Pallas equivalent of Head.forward.

    query: (Sq, D), key/value: (Sk, D)
    mask_idx: (rows, cols) index arrays (PyTorch-style advanced indexing) or None
    w_q, w_k: (key_dim, D) nn.Linear weights (bias=False); w_v: (val_dim, D)
    """
    Sq, D = query.shape
    Sk, _ = key.shape
    key_dim = w_q.shape[0]
    val_dim = w_v.shape[0]

    # ---- chip-generation-aware knobs -------------------------------------- #
    kind = _device_kind()
    is_v7 = "v7" in kind
    use_bf16_exp = ("v6" in kind) or is_v7          # v5e has no bf16 EUP path
    big_vmem = any(t in kind for t in ("v4", "v5", "v6"))   # 128 MiB parts
    vmem_limit = (96 if big_vmem else 48) * 1024 * 1024     # v7x: 64 MiB physical
    tq_max, tk_max = (512, 1024) if big_vmem else (256, 512)

    # ---- lane-dense padded head dims -------------------------------------- #
    Kp = _round_up(max(key_dim, 128), 128)
    Vp = _round_up(max(val_dim, 128), 128)

    # ---- tile selection ---------------------------------------------------- #
    TILE_Q = tq_max if Sq >= tq_max else _round_up(Sq, 8)
    TILE_K = tk_max if Sk >= tk_max else _round_up(Sk, 128)
    # v7x has 2 TensorCores: make sure the "parallel" query axis has >= 2 blocks.
    if is_v7 and Sq >= 2 * 128 and _round_up(Sq, TILE_Q) // TILE_Q < 2:
        TILE_Q = _round_up((Sq + 1) // 2, 128)
    Sq_pad = _round_up(Sq, TILE_Q)
    Sk_pad = _round_up(Sk, TILE_K)
    nq, nk = Sq_pad // TILE_Q, Sk_pad // TILE_K

    # ---- pad + cast streamed operands to bf16 in the wrapper --------------- #
    q_p = jnp.pad(query, ((0, Sq_pad - Sq), (0, 0))).astype(matmul_dtype)
    k_p = jnp.pad(key, ((0, Sk_pad - Sk), (0, 0))).astype(matmul_dtype)
    v_p = jnp.pad(value, ((0, Sk_pad - Sk), (0, 0))).astype(matmul_dtype)

    # Fold 1/sqrt(key_dim) into W_q (free); transpose to (in, out); zero-pad to
    # lane-dense widths; cast to bf16.
    scale = 1.0 / math.sqrt(float(key_dim))
    wq_t = jnp.pad(w_q.T * scale, ((0, 0), (0, Kp - key_dim))).astype(matmul_dtype)
    wk_t = jnp.pad(w_k.T, ((0, 0), (0, Kp - key_dim))).astype(matmul_dtype)
    wv_t = jnp.pad(w_v.T, ((0, 0), (0, Vp - val_dim))).astype(matmul_dtype)

    # ---- pre-project Q/K/V once (hoisted out of the attention inner loop) -- #
    qp = _project(q_p, wq_t, TILE_Q, vmem_limit)   # (Sq_pad, Kp) bf16, scale folded
    kp = _project(k_p, wk_t, TILE_K, vmem_limit)   # (Sk_pad, Kp) bf16
    vp = _project(v_p, wv_t, TILE_K, vmem_limit)   # (Sk_pad, Vp) bf16

    # ---- dense int8 mask + per-block flags --------------------------------- #
    # TODO(synk): PyTorch advanced-index scatter has no direct Pallas equivalent;
    # the (rows, cols) mask is materialized as a dense int8 mask in the wrapper.
    dense_mask = jnp.zeros((Sq_pad, Sk_pad), dtype=jnp.int8)
    if Sk_pad > Sk:
        dense_mask = dense_mask.at[:, Sk:].set(1)   # mask padded key columns
    if mask_idx is not None:
        rows, cols = mask_idx
        dense_mask = dense_mask.at[rows, cols].set(1)

    mb = dense_mask.reshape(nq, TILE_Q, nk, TILE_K)
    any_masked = (mb.max(axis=(1, 3)) > 0)
    all_masked = (mb.min(axis=(1, 3)) > 0)
    # 0 = no masked entries, 1 = partially masked, 2 = fully masked (skippable).
    block_flags = any_masked.astype(jnp.int32) + all_masked.astype(jnp.int32)

    # ---- flash attention over projected operands --------------------------- #
    out_padded = pl.pallas_call(
        functools.partial(_attn_kernel, use_bf16_exp=use_bf16_exp),
        out_shape=jax.ShapeDtypeStruct((Sq_pad, Vp), jnp.float32),
        grid_spec=pltpu.PrefetchScalarGridSpec(
            num_scalar_prefetch=1,                       # block_flags -> SMEM
            grid=(nq, nk),
            in_specs=[
                pl.BlockSpec((TILE_Q, Kp), lambda qi, ki, flags: (qi, 0)),  # Qp
                pl.BlockSpec((TILE_K, Kp), lambda qi, ki, flags: (ki, 0)),  # Kp
                pl.BlockSpec((TILE_K, Vp), lambda qi, ki, flags: (ki, 0)),  # Vp
                pl.BlockSpec((TILE_Q, TILE_K), lambda qi, ki, flags: (qi, ki)),  # mask
            ],
            out_specs=pl.BlockSpec((TILE_Q, Vp), lambda qi, ki, flags: (qi, 0)),
            scratch_shapes=[
                pltpu.VMEM((TILE_Q, 1), jnp.float32),    # running max m
                pltpu.VMEM((TILE_Q, 1), jnp.float32),    # running sum l
                pltpu.VMEM((TILE_Q, Vp), jnp.float32),   # output accumulator
            ],
        ),
        compiler_params=pltpu.CompilerParams(
            dimension_semantics=("parallel", "arbitrary"),
            vmem_limit_bytes=vmem_limit,
        ),
    )(block_flags, qp, kp, vp, dense_mask)

    return out_padded[:Sq, :val_dim]


# --------------------------------------------------------------------------- #
# Pure-JAX f32 reference mirroring the PyTorch code exactly.
# --------------------------------------------------------------------------- #
def _reference(query, key, value, mask_idx, w_q, w_k, w_v):
    qp = query @ w_q.T
    kp = key @ w_k.T
    vp = value @ w_v.T
    scaled = (qp @ kp.T) / jnp.sqrt(jnp.float32(qp.shape[1]))
    if mask_idx is not None:
        rows, cols = mask_idx
        scaled = scaled.at[rows, cols].set(-jnp.inf)
    probs = jax.nn.softmax(scaled, axis=1)
    return probs @ vp


if __name__ == "__main__":
    # Small shapes consistent with the module.
    seq_q, seq_k = 8, 8
    model_dim, key_dim, val_dim = 32, 16, 16

    k0 = jax.random.PRNGKey(0)
    kq, kk, kv, kwq, kwk, kwv = jax.random.split(k0, 6)

    query = jax.random.normal(kq, (seq_q, model_dim), dtype=jnp.float32)
    key = jax.random.normal(kk, (seq_k, model_dim), dtype=jnp.float32)
    value = jax.random.normal(kv, (seq_k, model_dim), dtype=jnp.float32)

    # Deterministic nn.Linear-style weights: (out_features, in_features), no bias.
    bound = 1.0 / jnp.sqrt(jnp.float32(model_dim))
    w_q = jax.random.uniform(kwq, (key_dim, model_dim), jnp.float32, -bound, bound)
    w_k = jax.random.uniform(kwk, (key_dim, model_dim), jnp.float32, -bound, bound)
    w_v = jax.random.uniform(kwv, (val_dim, model_dim), jnp.float32, -bound, bound)

    # Causal-ish mask given as index pairs, like the PyTorch call site:
    # mask[0] = row indices, mask[1] = col indices to set to -inf.
    rows, cols = jnp.triu_indices(seq_q, k=1)
    mask_idx = (rows, cols)

    out = head_forward(query, key, value, mask_idx, w_q, w_k, w_v)
    out = jax.block_until_ready(out)

    ref = _reference(query, key, value, mask_idx, w_q, w_k, w_v)
    assert out.shape == (seq_q, val_dim)
    # bf16 MXU operands / bf16 exp (v6e/v7x) + approx reciprocal => loose tolerance.
    assert jnp.allclose(out, ref, atol=5e-2, rtol=5e-2), "mismatch vs reference"

    print("KERNEL_OK")
</pallas_src>

<mosaic_0001>
module attributes {stable_mosaic.version = 11 : i64} {
  func.func @_proj_kernel(%arg0: i32, %arg1: memref<8x32xbf16, #tpu.memory_space<vmem>>, %arg2: memref<32x128xbf16, #tpu.memory_space<vmem>>, %arg3: memref<8x128xbf16, #tpu.memory_space<vmem>>) attributes {dimension_semantics = [#tpu.dimension_semantics<parallel>], iteration_bounds = array<i64: 1>, scalar_prefetch = 0 : i64, scratch_operands = 0 : i64, tpu.core_type = #tpu.core_type<tc>, window_params = [{transform_indices = @transform_0, window_bounds = array<i64: 8, 32>}, {pipeline_mode = #tpu.pipeline_mode<synchronous>, transform_indices = @transform_1, window_bounds = array<i64: 32, 128>}, {transform_indices = @transform_2, window_bounds = array<i64: 8, 128>}]} {
    %c0 = arith.constant 0 : index
    %c0_0 = arith.constant 0 : index
    %0 = vector.load %arg1[%c0, %c0_0] : memref<8x32xbf16, #tpu.memory_space<vmem>>, vector<8x32xbf16>
    %c0_1 = arith.constant 0 : index
    %c0_2 = arith.constant 0 : index
    %1 = vector.load %arg2[%c0_1, %c0_2] : memref<32x128xbf16, #tpu.memory_space<vmem>>, vector<32x128xbf16>
    %cst = arith.constant dense<0.000000e+00> : vector<8x128xf32>
    %2 = tpu.matmul %0, %1, %cst {dimension_numbers = #tpu.dot_dimension_numbers<[1], [0], [0], [1], [0, 0, 1, 1], [], []>} : vector<8x32xbf16>, vector<32x128xbf16>, vector<8x128xf32> -> vector<8x128xf32>
    %3 = arith.truncf %2 : vector<8x128xf32> to vector<8x128xbf16>
    %c0_3 = arith.constant 0 : index
    %c0_4 = arith.constant 0 : index
    %4 = vector.load %arg3[%c0_3, %c0_4] : memref<8x128xbf16, #tpu.memory_space<vmem>>, vector<8x128xbf16>
    tpu.vector_store %arg3[%c0_3, %c0_4], %3 {strides = array<i32>} : memref<8x128xbf16, #tpu.memory_space<vmem>>, vector<8x128xbf16>,
    return
  }
  func.func @transform_0(%arg0: i32) -> (i32, i32) {
    %c0_i32 = arith.constant 0 : i32
    %c0_i32_0 = arith.constant 0 : i32
    return %arg0, %c0_i32 : i32, i32
  }
  func.func @transform_1(%arg0: i32) -> (i32, i32) {
    %c0_i32 = arith.constant 0 : i32
    %c0_i32_0 = arith.constant 0 : i32
    %c0_i32_1 = arith.constant 0 : i32
    return %c0_i32, %c0_i32_0 : i32, i32
  }
  func.func @transform_2(%arg0: i32) -> (i32, i32) {
    %c0_i32 = arith.constant 0 : i32
    %c0_i32_0 = arith.constant 0 : i32
    return %arg0, %c0_i32 : i32, i32
  }
}

</mosaic_0001>

<llo_original>
// kernel: tpu_custom_call.1
$region0: #{tpu_custom_call.1}
  #allocation0 [shape = 'u32[]', space=smem, size = 0x4, offset = 0x4, fixed_abs, tag = 'smem constant byte address 0x4 - core index']
  #allocation1 [shape = 'u32[144,128]{1,0:T(1,128)}', space=vmem, size = 0x12000, scoped, tag = 'internal scratch']
  %s0 = inlined_call_operand.hbm [shape: bf16[8,32], index: 0, kind: input, shape index: {}]
  %s1 = inlined_call_operand.hbm [shape: bf16[32,128], index: 1, kind: input, shape index: {}]
  %s2 = inlined_call_operand.hbm [shape: bf16[8,128], index: 2, kind: output, shape index: {}]
  %s3 = sld [smem:[#allocation0]]
  $region26: #{tpu_custom_call.1} parent=0
    _
  %s5 = ssub.s32 1, %s3
  %s6 = scalar_select 0, %s5, %s3
  $region1: #{tpu_custom_call.1} parent=0
    #allocation2 [shape = 'u8[2048]{0}', space=vmem, size = 0x800, scoped, tag = 'input window, operand 0, single buffered']
    #allocation3 [shape = 's32[1]{0}', space=sflag, size = 0x4, scoped, tag = 'scoped memory for tpu_custom_call.1']
    #allocation4 [shape = 's32[1]{0}', space=sflag, size = 0x4, scoped, tag = 'scoped memory for tpu_custom_call.1']
    #allocation5 [shape = 'u8[8192]{0}', space=vmem, size = 0x2000, scoped, tag = 'input window, operand 1, single buffered']
    #allocation6 [shape = 's32[1]{0}', space=sflag, size = 0x4, scoped, tag = 'scoped memory for tpu_custom_call.1']
    #allocation7 [shape = 'u8[2048]{0}', space=vmem, size = 0x800, scoped, tag = 'output window, operand 0, single buffered']
    %7 = vsyncpa [#allocation3], 0
    %8 = vsyncpa [#allocation6], 0
    %9 = vsyncpa [#allocation4], 0
    // Predicated region
    $region2: #{tpu_custom_call.1} parent=1 // pred_check
      _
    $region3: #{tpu_custom_call.1} parent=1 // pred_check_branch
      %11 = sbr.rel (0) target = $region5
    $region4: #{tpu_custom_call.1} parent=1 // pred_region
      %s13 = ssub.s32 64, 64
      %14 = vsyncadd [#allocation3], %s13
      %s16 = sshll.u32 [#allocation2], 4
      %s17 = int_to_ptr.vmem [resolvable:$true] %s16
      %19 = dma.hbm_to_vmem [thread:$0]  %s0, 64, %s17, [#allocation3]
    $region5: #{tpu_custom_call.1} parent=1 // pred_fallthru
      _
    // Predicated region
    $region6: #{tpu_custom_call.1} parent=1 // pred_check
      _
    $region7: #{tpu_custom_call.1} parent=1 // pred_check_branch
      %21 = sbr.rel (0) target = $region9
    $region8: #{tpu_custom_call.1} parent=1 // pred_region
      %s23 = ssub.s32 256, 256
      %24 = vsyncadd [#allocation6], %s23
      %s25 = sshll.u32 [#allocation5], 4
      %s26 = int_to_ptr.vmem [resolvable:$true] %s25
      %31 = dma.hbm_to_vmem [thread:$0]  %s1, 256, %s26, [#allocation6], 64, 64, 4
    $region9: #{tpu_custom_call.1} parent=1 // pred_fallthru
      _
    // Predicated region
    $region10: #{tpu_custom_call.1} parent=1 // pred_check
      _
    $region11: #{tpu_custom_call.1} parent=1 // pred_check_branch
      %33 = sbr.rel (0) target = $region13
    $region12: #{tpu_custom_call.1} parent=1 // pred_region
      %34 = dma.done [#allocation3], 64
    $region13: #{tpu_custom_call.1} parent=1 // pred_fallthru
      _
    // Predicated region
    $region14: #{tpu_custom_call.1} parent=1 // pred_check
      _
    $region15: #{tpu_custom_call.1} parent=1 // pred_check_branch
      %36 = sbr.rel (0) target = $region17
    $region16: #{tpu_custom_call.1} parent=1 // pred_region
      %37 = dma.done [#allocation6], 256
    $region17: #{tpu_custom_call.1} parent=1 // pred_fallthru
      _
    %v39 = vld [vmem:[#allocation2] sm:$0xf]
    %v40 = vld [vmem:[#allocation5] sm:$0xf]
    %v41 = vld [vmem:[#allocation5 + $0x4] sm:$0xf]
    %v42 = vld [vmem:[#allocation5 + $0x8] sm:$0xf]
    %v43 = vld [vmem:[#allocation5 + $0xc] sm:$0xf]
    %v48 = vunpack.c.l.b16 %v40
    %v49 = vunpack.c.l.b16 %v41
    %v50 = vunpack.c.l.b16 %v42
    %v51 = vunpack.c.l.b16 %v43
    %v52 = vpack.c.b16 %v49, %v48
    %v53 = vpack.c.b16 %v51, %v50
    %vm56 = vcmask 261120
    %v58 = vsel %vm56, %v39, 0
    %60 = vmatprep.subr.bf16.mxu0 0
    %61 = vmatpush1.bf16.msra.mxu0 %v52
    %62 = vmatprep.subr.bf16.mxu0 0
    %63 = vmatpush1.bf16.msra.mxu0 %v53
    %64 = vmatprep.subr.bf16.mxu0 0
    %65 = vmatpush1.bf16.msra.mxu0 0
    %66 = vmatprep.subr.bf16.mxu0 0
    %67 = vmatpush1.bf16.msra.mxu0 0
    %68 = vmatprep.subr.bf16.mxu0 0
    %69 = vmatpush1.bf16.msra.mxu0 0
    %70 = vmatprep.subr.bf16.mxu0 0
    %71 = vmatpush1.bf16.msra.mxu0 0
    %72 = vmatprep.subr.bf16.mxu0 0
    %73 = vmatpush1.bf16.msra.mxu0 0
    %74 = vmatprep.subr.bf16.mxu0 0
    %75 = vmatpush1.bf16.msra.mxu0 0
    %76 = vmatprep.subr.bf16.mxu0 0
    %77 = vmatpush1.bf16.msra.mxu0 0
    %78 = vmatprep.subr.bf16.mxu0 0
    %79 = vmatpush1.bf16.msra.mxu0 0
    %80 = vmatprep.subr.bf16.mxu0 0
    %81 = vmatpush1.bf16.msra.mxu0 0
    %82 = vmatprep.subr.bf16.mxu0 0
    %83 = vmatpush1.bf16.msra.mxu0 0
    %84 = vmatprep.subr.bf16.mxu0 0
    %85 = vmatpush1.bf16.msra.mxu0 0
    %86 = vmatprep.subr.bf16.mxu0 0
    %87 = vmatpush1.bf16.msra.mxu0 0
    %88 = vmatprep.subr.bf16.mxu0 0
    %89 = vmatpush1.bf16.msra.mxu0 0
    %90 = vmatprep.subr.bf16.mxu0 0
    %91 = vmatpush1.bf16.msra.mxu0 0
    %92 = vmatprep.mubr.bf16.mxu0 0
    %93 = vmatmul.mubr.bf16.gmra.mrb[0].mxu0 %v58
    %v94 = vpop.f32.mrb[0].mxu0
    %v95 = vadd.f32 0.0, %v94
    %v96 = vpop.f32.mrb[0].mxu0
    %v97 = vpop.f32.mrb[0].mxu0
    %v98 = vpop.f32.mrb[0].mxu0
    %99 = vdwg.mxu0
    %v100 = vpack.c.bf16 %v95, %v95
    %101 = vst [vmem:[#allocation7] sm:$0xf] %v100
    // Predicated region
    $region18: #{tpu_custom_call.1} parent=1 // pred_check
      _
    $region19: #{tpu_custom_call.1} parent=1 // pred_check_branch
      %103 = sbr.rel (0) target = $region21
    $region20: #{tpu_custom_call.1} parent=1 // pred_region
      %s105 = ssub.s32 64, 64
      %106 = vsyncadd [#allocation4], %s105
      %s108 = sshll.u32 [#allocation7], 4
      %s109 = int_to_ptr.vmem [resolvable:$true] %s108
      %111 = dma.vmem_to_hbm [thread:$0]  %s109, 64, %s2, [#allocation4]
    $region21: #{tpu_custom_call.1} parent=1 // pred_fallthru
      _
    // Predicated region
    $region22: #{tpu_custom_call.1} parent=1 // pred_check
      _
    $region23: #{tpu_custom_call.1} parent=1 // pred_check_branch
      %113 = sbr.rel (0) target = $region25
    $region24: #{tpu_custom_call.1} parent=1 // pred_region
      %114 = dma.done [#allocation4], 64
    $region25: #{tpu_custom_call.1} parent=1 // pred_fallthru
      _
    %115 = vsyncpa [#allocation3], 1
    %116 = vsyncpa [#allocation6], 1
    %117 = vsyncpa [#allocation4], 1

</llo_original>
